<compile_context>
chip_gen: v6e
topology: v6e:2x2x1
jax: 0.10.0
libtpu: 0.0.40
codegen_flags: <defaults>
</compile_context>

<pallas_src>
import functools
import math

import jax
import jax.numpy as jnp
from jax.experimental import pallas as pl
from jax.experimental.pallas import tpu as pltpu


# ----------------------------------------------------------------------------
# Pallas kernel
# ----------------------------------------------------------------------------
def _rmsnorm_kernel(x_ref, g_ref, o_ref, *, scale):
    """l2-normalize each row, then apply gamma * sqrt(dim)."""
    x = x_ref[...]                                   # [tile, D], native dtype
    xf = x.astype(jnp.float32)

    # F.normalize(x, dim=-1): x / max(||x||_2, 1e-12)
    # rsqrt(max(norm_sq, 1e-24)) == 1 / max(||x||_2, 1e-12)  (EUP op)
    norm_sq = jnp.sum(xf * xf, axis=-1, keepdims=True)          # [tile, 1] f32
    inv = jax.lax.rsqrt(jnp.maximum(norm_sq, 1e-24)) * scale    # fold sqrt(dim)

    if x.dtype == jnp.float32:
        # Exact f32 path (matches the PyTorch reference bit-for-bit-ish).
        y = (xf * inv) * g_ref[...].astype(jnp.float32)
    else:
        # bf16 / low-precision path: keep the full-tile multiplies in the
        # native dtype (packed VALU on v6e/v7x, no [tile, D] f32 temp for the
        # store path); only the square-sum accumulation above was in f32.
        y = (x * inv.astype(x.dtype)) * g_ref[...].astype(x.dtype)

    o_ref[...] = y.astype(o_ref.dtype)


# ----------------------------------------------------------------------------
# Wrapper
# ----------------------------------------------------------------------------
def _round_up(n, m):
    return ((n + m - 1) // m) * m


def _sublane(dtype):
    # f32 -> 8 rows per sublane group, bf16 -> 16, int8/fp8 -> 32.
    itemsize = jnp.dtype(dtype).itemsize
    return 8 * max(1, 4 // itemsize)


def _choose_tile(n, d, dtype, *, vmem_budget_bytes=32 << 20, max_tile=1024):
    """Largest sublane-multiple row tile fitting the VMEM budget."""
    sub = _sublane(dtype)
    elem = jnp.dtype(dtype).itemsize
    # Double-buffered input + output blocks, plus the f32 square temp.
    per_row = 2 * 2 * d * elem + d * 4
    tile = max(sub, min(max_tile, vmem_budget_bytes // max(per_row, 1)))
    tile = (tile // sub) * sub

    n_rows = _round_up(n, sub)
    tile = min(tile, n_rows)
    # Keep >= 2 grid steps when there is enough work, so v7x's second
    # TensorCore gets a share of the (parallel) grid axis.
    if n_rows >= 2 * sub:
        half = _round_up(-(-n_rows // 2), sub)
        tile = min(tile, half)
    return max(tile, sub)


def rmsnorm(x, gamma, *, vmem_budget_bytes=32 << 20):
    """RMSNorm over the last dim.

    x:     [..., D]
    gamma: [D]  (affine parameter; pass jnp.ones(D) for affine=False)
    """
    orig_shape = x.shape
    d = orig_shape[-1]
    n = math.prod(orig_shape[:-1]) if len(orig_shape) > 1 else 1
    scale = float(d) ** 0.5

    x2 = x.reshape(n, d)
    g2 = gamma.reshape(1, d).astype(x.dtype)

    tile = _choose_tile(n, d, x.dtype, vmem_budget_bytes=vmem_budget_bytes)
    grid = pl.cdiv(n, tile)  # partial last block handled by Pallas masking

    out = pl.pallas_call(
        functools.partial(_rmsnorm_kernel, scale=scale),
        out_shape=jax.ShapeDtypeStruct((n, d), x.dtype),
        grid_spec=pltpu.PrefetchScalarGridSpec(
            num_scalar_prefetch=0,
            grid=(grid,),
            in_specs=[
                pl.BlockSpec((tile, d), lambda i: (i, 0)),
                pl.BlockSpec((1, d), lambda i: (0, 0)),  # grid-constant gamma
            ],
            out_specs=pl.BlockSpec((tile, d), lambda i: (i, 0)),
        ),
        compiler_params=pltpu.CompilerParams(
            dimension_semantics=("parallel",),
            # Lift the conservative default scoped-VMEM limit (16 MiB on v5e,
            # 32 MiB on v6e/v7x) but stay well under v7x's 64 MiB physical.
            vmem_limit_bytes=48 << 20,
        ),
    )(x2, g2)

    return out.reshape(orig_shape)


# ----------------------------------------------------------------------------
# Demo / self-check
# ----------------------------------------------------------------------------
if __name__ == "__main__":
    B, S, D = 2, 8, 256  # D multiple of 128 -> lane-dense stores

    key = jax.random.PRNGKey(0)
    kx, kg = jax.random.split(key)
    x = jax.random.normal(kx, (B, S, D), jnp.float32)
    gamma = 1.0 + 0.1 * jax.random.normal(kg, (D,), jnp.float32)

    y = rmsnorm(x, gamma)
    jax.block_until_ready(y)

    # Pure-JAX reference of the PyTorch forward.
    norm = jnp.sqrt(jnp.sum(x * x, axis=-1, keepdims=True))
    ref = x / jnp.maximum(norm, 1e-12) * gamma * (float(D) ** 0.5)

    assert y.shape == x.shape
    assert bool(jnp.all(jnp.isfinite(y)))
    assert bool(jnp.allclose(y, ref, rtol=1e-5, atol=1e-5))
    print("KERNEL_OK")
</pallas_src>

<mosaic_0001>
module attributes {stable_mosaic.version = 11 : i64} {
  func.func @_rmsnorm_kernel(%arg0: i32, %arg1: memref<8x256xf32, #tpu.memory_space<vmem>>, %arg2: memref<1x256xf32, #tpu.memory_space<vmem>>, %arg3: memref<8x256xf32, #tpu.memory_space<vmem>>) attributes {dimension_semantics = [#tpu.dimension_semantics<parallel>], iteration_bounds = array<i64: 2>, scalar_prefetch = 0 : i64, scratch_operands = 0 : i64, tpu.core_type = #tpu.core_type<tc>, window_params = [{transform_indices = @transform_0, window_bounds = array<i64: 8, 256>}, {pipeline_mode = #tpu.pipeline_mode<synchronous>, transform_indices = @transform_1, window_bounds = array<i64: 1, 256>}, {transform_indices = @transform_2, window_bounds = array<i64: 8, 256>}]} {
    %c0 = arith.constant 0 : index
    %c0_0 = arith.constant 0 : index
    %0 = vector.load %arg1[%c0, %c0_0] : memref<8x256xf32, #tpu.memory_space<vmem>>, vector<8x256xf32>
    %1 = arith.mulf %0, %0 : vector<8x256xf32>
    %cst = arith.constant dense<0.000000e+00> : vector<8xf32>
    %2 = vector.multi_reduction <add>, %1, %cst [1] : vector<8x256xf32> to vector<8xf32>
    %3 = vector.shape_cast %2 : vector<8xf32> to vector<8x1xf32>
    %cst_1 = arith.constant 1.000000e-24 : f32
    %4 = vector.broadcast %cst_1 : f32 to vector<8x1xf32>
    %5 = arith.maximumf %3, %4 : vector<8x1xf32>
    %6 = math.rsqrt %5 : vector<8x1xf32>
    %cst_2 = arith.constant 1.600000e+01 : f32
    %7 = vector.broadcast %cst_2 : f32 to vector<8x1xf32>
    %8 = arith.mulf %6, %7 : vector<8x1xf32>
    %9 = vector.broadcast %8 : vector<8x1xf32> to vector<8x256xf32>
    %10 = arith.mulf %0, %9 : vector<8x256xf32>
    %c0_3 = arith.constant 0 : index
    %c0_4 = arith.constant 0 : index
    %11 = vector.load %arg2[%c0_3, %c0_4] : memref<1x256xf32, #tpu.memory_space<vmem>>, vector<1x256xf32>
    %12 = vector.broadcast %11 : vector<1x256xf32> to vector<8x256xf32>
    %13 = arith.mulf %10, %12 : vector<8x256xf32>
    %c0_5 = arith.constant 0 : index
    %c0_6 = arith.constant 0 : index
    %14 = vector.load %arg3[%c0_5, %c0_6] : memref<8x256xf32, #tpu.memory_space<vmem>>, vector<8x256xf32>
    tpu.vector_store %arg3[%c0_5, %c0_6], %13 {strides = array<i32>} : memref<8x256xf32, #tpu.memory_space<vmem>>, vector<8x256xf32>,
    return
  }
  func.func @transform_0(%arg0: i32) -> (i32, i32) {
    %c0_i32 = arith.constant 0 : i32
    %c0_i32_0 = arith.constant 0 : i32
    return %arg0, %c0_i32 : i32, i32
  }
  func.func @transform_1(%arg0: i32) -> (i32, i32) {
    %c0_i32 = arith.constant 0 : i32
    %c0_i32_0 = arith.constant 0 : i32
    %c0_i32_1 = arith.constant 0 : i32
    return %c0_i32, %c0_i32_0 : i32, i32
  }
  func.func @transform_2(%arg0: i32) -> (i32, i32) {
    %c0_i32 = arith.constant 0 : i32
    %c0_i32_0 = arith.constant 0 : i32
    return %arg0, %c0_i32 : i32, i32
  }
}

</mosaic_0001>

<llo_original>
// kernel: tpu_custom_call.1
$region0: #{tpu_custom_call.1}
  #allocation0 [shape = 'u32[]', space=smem, size = 0x4, offset = 0x4, fixed_abs, tag = 'smem constant byte address 0x4 - core index']
  #allocation1 [shape = 'u32[144,128]{1,0:T(1,128)}', space=vmem, size = 0x12000, scoped, tag = 'internal scratch']
  %s0 = inlined_call_operand.hbm [shape: f32[16,256], index: 0, kind: input, shape index: {}]
  %s1 = inlined_call_operand.hbm [shape: f32[1,256], index: 1, kind: input, shape index: {}]
  %s2 = inlined_call_operand.hbm [shape: f32[16,256], index: 2, kind: output, shape index: {}]
  %s3 = sld [smem:[#allocation0]]
  $region49: #{tpu_custom_call.1} parent=0
    _
  %s5 = ssub.s32 1, %s3
  %s6 = scalar_select 0, %s5, %s3
  $region1: #{tpu_custom_call.1} parent=0
    #allocation2 [shape = 'u8[16384]{0}', space=vmem, size = 0x4000, scoped, tag = 'input window, operand 0']
    #allocation3 [shape = 's32[2]{0}', space=sflag, size = 0x8, scoped, tag = 'scoped memory for tpu_custom_call.1']
    #allocation4 [shape = 's32[2]{0}', space=sflag, size = 0x8, scoped, tag = 'scoped memory for tpu_custom_call.1']
    #allocation5 [shape = 'u8[1024]{0}', space=vmem, size = 0x400, scoped, tag = 'input window, operand 1, single buffered']
    #allocation6 [shape = 's32[1]{0}', space=sflag, size = 0x4, scoped, tag = 'scoped memory for tpu_custom_call.1']
    #allocation7 [shape = 'u8[16384]{0}', space=vmem, size = 0x4000, scoped, tag = 'output window, operand 0']
    %7 = vsyncpa [#allocation3], 0
    %s8 = scalar_lea.sflag [#allocation3], 1
    %9 = vsyncpa %s8, 0
    %10 = vsyncpa [#allocation6], 0
    %11 = vsyncpa [#allocation4], 0
    %s12 = scalar_lea.sflag [#allocation4], 1
    %13 = vsyncpa %s12, 0
    loop: start=0, step=1, limit=4
    $region2: #{tpu_custom_call.1} parent=1 // loop_pre_header
      _
    $region3: #{tpu_custom_call.1} parent=1 // loop_header
      %s15 = sphi 0, %s19
      %p16 = scmp.ge.s32.totalorder %s15, 4
      %s25 = sphi 0, %s27
      %s28 = sphi 0, %s25
      %s29 = sphi 0, %s28
      %s45 = sphi 0, %s29
      %s49 = sphi 0, %s49
      %s51 = sphi 0, %s49
      %s52 = sphi 0, %s51
      %s66 = sphi 0, %s52
      %s72 = sphi 0, %s74
      %s75 = sphi 0, %s72
      %s76 = sphi 0, %s75
      %s92 = sphi 0, %s76
    $region4: #{tpu_custom_call.1} parent=1 // loop_header_branch
      %18 = sbr.rel (%p16) target = $region8
    $region5: #{tpu_custom_call.1} parent=1 // loop_body
      %s20 = ssub.s32 %s15, 1
      %s21 = ssub.s32 %s15, 2
      %s22 = sadd.s32 %s15, 1
      %s23 = ssub.s32 %s15, %s22
      %p24 = scmp.eq.s32.totalorder %s23, 0
      %s26 = sadd.s32 %s25, 1
      %s27 = scalar_select %p24, %s25, %s26
      %p30 = pneg %p24
      %p31 = scmp.eq.s32.totalorder %s15, 1
      %p32 = por %p30, %p31
      %p33 = scmp.ne.s32.totalorder %s25, %s28
      %p34 = scmp.eq.s32.totalorder %s15, 0
      %p35 = por %p33, %p34
      %p36 = scmp.ne.s32.totalorder %s25, %s28
      %p37 = scmp.eq.s32.totalorder %s20, 1
      %p38 = por %p36, %p37
      %p39 = scmp.ne.s32.totalorder %s28, %s29
      %p40 = scmp.eq.s32.totalorder %s20, 0
      %p41 = por %p39, %p40
      %p42 = scmp.ne.s32.totalorder %s28, %s29
      %p43 = scmp.eq.s32.totalorder %s21, 1
      %p44 = por %p42, %p43
      %p46 = scmp.ne.s32.totalorder %s29, %s45
      %p47 = scmp.eq.s32.totalorder %s21, 0
      %p48 = por %p46, %p47
      %s50 = sadd.s32 %s49, 1
      %p53 = scmp.eq.s32.totalorder %s15, 1
      %p54 = scmp.ne.s32.totalorder %s49, %s51
      %p55 = scmp.eq.s32.totalorder %s15, 0
      %p56 = por %p54, %p55
      %p57 = scmp.ne.s32.totalorder %s49, %s51
      %p58 = scmp.eq.s32.totalorder %s20, 1
      %p59 = por %p57, %p58
      %p60 = scmp.ne.s32.totalorder %s51, %s52
      %p61 = scmp.eq.s32.totalorder %s20, 0
      %p62 = por %p60, %p61
      %p63 = scmp.ne.s32.totalorder %s51, %s52
      %p64 = scmp.eq.s32.totalorder %s21, 1
      %p65 = por %p63, %p64
      %p67 = scmp.ne.s32.totalorder %s52, %s66
      %p68 = scmp.eq.s32.totalorder %s21, 0
      %p69 = por %p67, %p68
      %s70 = ssub.s32 %s15, %s22
      %p71 = scmp.eq.s32.totalorder %s70, 0
      %s73 = sadd.s32 %s72, 1
      %s74 = scalar_select %p71, %s72, %s73
      %p77 = pneg %p71
      %p78 = scmp.eq.s32.totalorder %s15, 1
      %p79 = por %p77, %p78
      %p80 = scmp.ne.s32.totalorder %s72, %s75
      %p81 = scmp.eq.s32.totalorder %s15, 0
      %p82 = por %p80, %p81
      %p83 = scmp.ne.s32.totalorder %s72, %s75
      %p84 = scmp.eq.s32.totalorder %s20, 1
      %p85 = por %p83, %p84
      %p86 = scmp.ne.s32.totalorder %s75, %s76
      %p87 = scmp.eq.s32.totalorder %s20, 0
      %p88 = por %p86, %p87
      %p89 = scmp.ne.s32.totalorder %s75, %s76
      %p90 = scmp.eq.s32.totalorder %s21, 1
      %p91 = por %p89, %p90
      %p93 = scmp.ne.s32.totalorder %s76, %s92
      %p94 = scmp.eq.s32.totalorder %s21, 0
      %p95 = por %p93, %p94
      %p96 = scmp.le.s32.totalorder 1, %s15
      %p97 = scmp.lt.s32.totalorder %s15, 3
      %p98 = pnand %p96, %p97
      %p99 = pneg %p98
      // Predicated region
      $region9: #{tpu_custom_call.1} parent=5 // pred_check
        _
      $region10: #{tpu_custom_call.1} parent=5 // pred_check_branch
        %101 = sbr.rel (%p98) target = $region12
      $region11: #{tpu_custom_call.1} parent=5 // pred_region
        %s102 = ssub.s32 %s15, 1
        // Predicated region
        $region13: #{tpu_custom_call.1} parent=11 // pred_check
          %p103 = pneg %p62
        $region14: #{tpu_custom_call.1} parent=11 // pred_check_branch
          %105 = sbr.rel (%p103) target = $region16
        $region15: #{tpu_custom_call.1} parent=11 // pred_region
          %s107 = ssub.s32 32, 32
          %108 = vsyncadd [#allocation6], %s107
          %s110 = sshll.u32 [#allocation5], 4
          %s111 = int_to_ptr.vmem [resolvable:$true] %s110
          %113 = dma.hbm_to_vmem [thread:$0]  %s1, 32, %s111, [#allocation6]
        $region16: #{tpu_custom_call.1} parent=11 // pred_fallthru
          _
      $region12: #{tpu_custom_call.1} parent=5 // pred_fallthru
        _
      %p114 = scmp.lt.s32.totalorder %s15, 2
      // Predicated region
      $region17: #{tpu_custom_call.1} parent=5 // pred_check
        %p115 = pneg %p114
      $region18: #{tpu_custom_call.1} parent=5 // pred_check_branch
        %117 = sbr.rel (%p115) target = $region20
      $region19: #{tpu_custom_call.1} parent=5 // pred_region
        // Predicated region
        $region21: #{tpu_custom_call.1} parent=19 // pred_check
          %p118 = pneg %p35
        $region22: #{tpu_custom_call.1} parent=19 // pred_check_branch
          %120 = sbr.rel (%p118) target = $region24
        $region23: #{tpu_custom_call.1} parent=19 // pred_region
          %s121 = sand.u32 %s25, 1
          %s122 = scalar_lea.sflag [#allocation3], %s121
          %s123 = sand.u32 %s25, 1
          %s124 = smul.addr %s123, 16
          %s125 = scalar_lea.vmem [#allocation2], %s124
          %s127 = ssub.s32 256, 256
          %128 = vsyncadd %s122, %s127
          %s129 = smul.addr %s15, 2
          %s130 = smul.addr %s129, 128
          %s131 = scalar_lea.hbm %s0, %s130
          %s133 = sshll.u32 %s125, 4
          %s134 = int_to_ptr.vmem [resolvable:$true] %s133
          %136 = dma.hbm_to_vmem [thread:$0]  %s131, 256, %s134, %s122
        $region24: #{tpu_custom_call.1} parent=19 // pred_fallthru
          _
      $region20: #{tpu_custom_call.1} parent=5 // pred_fallthru
        _
      %p137 = scmp.le.s32.totalorder 1, %s15
      %p138 = scmp.lt.s32.totalorder %s15, 3
      %p139 = pnand %p137, %p138
      %p140 = pneg %p139
      // Predicated region
      $region25: #{tpu_custom_call.1} parent=5 // pred_check
        _
      $region26: #{tpu_custom_call.1} parent=5 // pred_check_branch
        %142 = sbr.rel (%p139) target = $region28
      $region27: #{tpu_custom_call.1} parent=5 // pred_region
        %s143 = ssub.s32 %s15, 1
        %s144 = sand.u32 %s28, 1
        %s145 = scalar_lea.sflag [#allocation3], %s144
        %s146 = sand.u32 %s28, 1
        %s147 = smul.addr %s146, 16
        %s148 = scalar_lea.vmem [#allocation2], %s147
        // Predicated region
        $region29: #{tpu_custom_call.1} parent=27 // pred_check
          %p149 = pneg %p41
        $region30: #{tpu_custom_call.1} parent=27 // pred_check_branch
          %151 = sbr.rel (%p149) target = $region32
        $region31: #{tpu_custom_call.1} parent=27 // pred_region
          %152 = dma.done %s145, 256
        $region32: #{tpu_custom_call.1} parent=27 // pred_fallthru
          _
        // Predicated region
        $region33: #{tpu_custom_call.1} parent=27 // pred_check
          %p153 = pneg %p62
        $region34: #{tpu_custom_call.1} parent=27 // pred_check_branch
          %155 = sbr.rel (%p153) target = $region36
        $region35: #{tpu_custom_call.1} parent=27 // pred_region
          %156 = dma.done [#allocation6], 32
        $region36: #{tpu_custom_call.1} parent=27 // pred_fallthru
          _
        %s157 = sand.u32 %s28, 1
        %s158 = scalar_lea.sflag [#allocation3], %s157
        %s159 = sand.u32 %s28, 1
        %s160 = smul.addr %s159, 16
        %s161 = scalar_lea.vmem [#allocation2], %s160
        %p162 = pneg %p41
        %p163 = pneg %p38
        %p164 = pneg %p62
        %p165 = pneg %p59
        %p166 = pneg %p88
        %p167 = pneg %p85
        %s168 = sand.u32 %s75, 1
        %s169 = scalar_lea.sflag [#allocation4], %s168
        %s170 = sand.u32 %s75, 1
        %s171 = smul.addr %s170, 16
        %s172 = scalar_lea.vmem [#allocation7], %s171
        %v173 = vld [vmem:[%s148] sm:$0xff]
        %v174 = vld [vmem:[%s148 + $0x8] sm:$0xff]
        %v175 = vmul.f32 %v173, %v173
        %v176 = vmul.f32 %v174, %v174
        %v177 = vadd.f32 %v175, %v176
        %178 = vadd.xlane.f32.xlu0 %v177
        %v179 = vpop.xlane.xlu0 %178
        %v180 = vmax.f32 %v179, 1e-24
        %v181 = vrsqrt.pop %v180
        %v182 = vmul.f32 %v181, 16.0
        %v183 = vmul.f32 %v173, %v182
        %v184 = vmul.f32 %v174, %v182
        %v185 = vld [vmem:[#allocation5] sm:$0x3]
        %v187 = vlaneseq
        %v188 = vshrl.u32 %v187, 7
        %v189 = vsub.s32 0, %v188
        %v190 = vrot.slane %v185, %v189
        %v191 = vlaneseq
        %v192 = vshrl.u32 %v191, 7
        %v193 = vsub.s32 1, %v192
        %v194 = vrot.slane %v185, %v193
        %v197 = vmul.f32 %v183, %v190
        %v198 = vmul.f32 %v184, %v194
        %199 = vst [vmem:[%s172] sm:$0xff] %v197
        %200 = vst [vmem:[%s172 + $0x8] sm:$0xff] %v198
        %s201 = sand.u32 %s75, 1
        %s202 = scalar_lea.sflag [#allocation4], %s201
        %s203 = sand.u32 %s75, 1
        %s204 = smul.addr %s203, 16
        %s205 = scalar_lea.vmem [#allocation7], %s204
        // Predicated region
        $region37: #{tpu_custom_call.1} parent=27 // pred_check
          %p206 = pneg %p85
        $region38: #{tpu_custom_call.1} parent=27 // pred_check_branch
          %208 = sbr.rel (%p206) target = $region40
        $region39: #{tpu_custom_call.1} parent=27 // pred_region
          %s210 = ssub.s32 256, 256
          %211 = vsyncadd %s202, %s210
          %s212 = smul.addr %s20, 2
          %s213 = smul.addr %s212, 128
          %s214 = scalar_lea.hbm %s2, %s213
          %s216 = sshll.u32 %s205, 4
          %s217 = int_to_ptr.vmem [resolvable:$true] %s216
          %219 = dma.vmem_to_hbm [thread:$0]  %s217, 256, %s214, %s202
        $region40: #{tpu_custom_call.1} parent=27 // pred_fallthru
          _
      $region28: #{tpu_custom_call.1} parent=5 // pred_fallthru
        _
      %p220 = scmp.le.s32.totalorder 2, %s15
      // Predicated region
      $region41: #{tpu_custom_call.1} parent=5 // pred_check
        %p221 = pneg %p220
      $region42: #{tpu_custom_call.1} parent=5 // pred_check_branch
        %223 = sbr.rel (%p221) target = $region44
      $region43: #{tpu_custom_call.1} parent=5 // pred_region
        %s224 = ssub.s32 %s15, 2
        // Predicated region
        $region45: #{tpu_custom_call.1} parent=43 // pred_check
          %p225 = pneg %p91
        $region46: #{tpu_custom_call.1} parent=43 // pred_check_branch
          %227 = sbr.rel (%p225) target = $region48
        $region47: #{tpu_custom_call.1} parent=43 // pred_region
          %s228 = sand.u32 %s76, 1
          %s229 = scalar_lea.sflag [#allocation4], %s228
          %s230 = sand.u32 %s76, 1
          %s231 = smul.addr %s230, 16
          %s232 = scalar_lea.vmem [#allocation7], %s231
          %233 = dma.done %s229, 256
        $region48: #{tpu_custom_call.1} parent=43 // pred_fallthru
          _
      $region44: #{tpu_custom_call.1} parent=5 // pred_fallthru
        _
    $region6: #{tpu_custom_call.1} parent=1 // loop_footer
      %s19 = sadd.s32 1, %s15
    $region7: #{tpu_custom_call.1} parent=1 // loop_footer_branch
      %14 = sbr.rel target = $region3
    $region8: #{tpu_custom_call.1} parent=1 // loop_exit
      _
    %234 = vsyncpa [#allocation3], 1
    %s235 = scalar_lea.sflag [#allocation3], 1
    %236 = vsyncpa %s235, 1
    %237 = vsyncpa [#allocation6], 1
    %238 = vsyncpa [#allocation4], 1
    %s239 = scalar_lea.sflag [#allocation4], 1
    %240 = vsyncpa %s239, 1

</llo_original>
